<compile_context>
chip_gen: v6e
topology: v6e:2x2x1
jax: 0.10.0
libtpu: 0.0.40
codegen_flags: <defaults>
</compile_context>

<pallas_src>
import functools
import math

import jax
import jax.numpy as jnp
from jax.experimental import pallas as pl
from jax.experimental.pallas import tpu as pltpu


def _dwconv_kernel(x_ref, xpos_ref, w_ref, b_ref, o_ref, *, width, ksize):
    """Shared k x k, stride-1, 'same'-padded conv over flattened planes.

    x_ref    : (NT, H*W) f32 VMEM  -- NT (batch*channel) planes, row-major flattened
    xpos_ref : (1,  H*W) i32 VMEM  -- x (column) coordinate of every flattened pixel
    w_ref    : (k, k)    f32 SMEM  -- shared conv kernel (resident)
    b_ref    : (1,)      f32 SMEM  -- shared bias (resident)
    o_ref    : (NT, H*W) f32 VMEM
    """
    x = x_ref[...]
    nt, hw = x.shape
    half = ksize // 2

    # Flat pixel index and x-coordinate, hoisted out of the tap loop.
    pos = jax.lax.broadcasted_iota(jnp.int32, (nt, hw), 1)
    xpos = jnp.broadcast_to(xpos_ref[...], (nt, hw))

    acc = jnp.zeros((nt, hw), jnp.float32)
    for ky in range(ksize):
        for kx in range(ksize):
            dy = ky - half
            dx = kx - half
            s = dy * width + dx                     # flat offset of this tap
            # t[p] = x[p + s]  (circular; out-of-plane positions masked below).
            t = x if s == 0 else pltpu.roll(x, shift=(-s) % hw, axis=1)
            valid = None
            if dy < 0:                              # needs row y+dy >= 0
                valid = pos >= (-dy) * width
            elif dy > 0:                            # needs row y+dy <= H-1
                valid = pos < hw - dy * width
            if dx < 0:                              # needs col x+dx >= 0
                vx = xpos >= -dx
                valid = vx if valid is None else (valid & vx)
            elif dx > 0:                            # needs col x+dx <= W-1
                vx = xpos < width - dx
                valid = vx if valid is None else (valid & vx)
            if valid is not None:
                t = jnp.where(valid, t, 0.0)
            acc = acc + w_ref[ky, kx] * t
    o_ref[...] = acc + b_ref[0]


def _pick_row_tile(n, hw, budget_bytes=8 * 1024 * 1024):
    """Largest row tile (multiple of 8) whose in+out double-buffered f32 blocks fit."""
    per_row = 2 * 2 * 4 * hw                        # (in + out) * 2 buffers * 4 B
    max_rows = max(8, budget_bytes // per_row)
    if n <= max_rows:
        return n                                    # full axis == full dim, always legal
    return max(8, (max_rows // 8) * 8)


class DepthwiseConvPallas:
    """Pallas TPU port of `depthwise_conv` (shared Conv2d(1, 1, k, k) per plane)."""

    def __init__(self, key, kernel_size=3, stride=1, padding=1):
        if stride != 1 or kernel_size % 2 != 1 or padding != kernel_size // 2:
            # TODO(synk): only the module's default (k=3, stride=1, 'same' padding)
            # configuration is implemented.
            raise NotImplementedError("only odd k, stride=1, padding=k//2 supported")
        self.ksize = kernel_size
        fan_in = 1 * kernel_size * kernel_size      # Conv2d(1, 1, k, k) default init
        bound = 1.0 / math.sqrt(fan_in)
        kw, kb = jax.random.split(key)
        self.weight = jax.random.uniform(kw, (kernel_size, kernel_size), jnp.float32,
                                         minval=-bound, maxval=bound)
        self.bias = jax.random.uniform(kb, (1,), jnp.float32,
                                       minval=-bound, maxval=bound)
        self._forward_jit = jax.jit(self._forward)

    def _forward(self, x):
        x = x.astype(jnp.float32)
        B, C, H, W = x.shape
        N, HW = B * C, H * W
        x_flat = x.reshape(N, HW)                   # free reshape, no HBM copy
        xpos = (jnp.arange(HW, dtype=jnp.int32) % W).reshape(1, HW)

        tile_n = _pick_row_tile(N, HW)
        n_pad = ((N + tile_n - 1) // tile_n) * tile_n
        if n_pad != N:
            x_flat = jnp.pad(x_flat, ((0, n_pad - N), (0, 0)))

        kernel = functools.partial(_dwconv_kernel, width=W, ksize=self.ksize)
        out = pl.pallas_call(
            kernel,
            out_shape=jax.ShapeDtypeStruct((n_pad, HW), jnp.float32),
            grid=(n_pad // tile_n,),
            in_specs=[
                pl.BlockSpec((tile_n, HW), lambda i: (i, 0)),
                pl.BlockSpec((1, HW), lambda i: (0, 0)),                 # resident
                pl.BlockSpec(memory_space=pltpu.MemorySpace.SMEM),       # weights
                pl.BlockSpec(memory_space=pltpu.MemorySpace.SMEM),       # bias
            ],
            out_specs=pl.BlockSpec((tile_n, HW), lambda i: (i, 0)),
            compiler_params=pltpu.CompilerParams(
                dimension_semantics=("parallel",),
                vmem_limit_bytes=32 * 1024 * 1024,
            ),
        )(x_flat, xpos, self.weight, self.bias)

        if n_pad != N:
            out = out[:N]
        return out.reshape(B, C, H, W)

    def forward(self, x):
        return self._forward_jit(x)


def _reference(x, weight, bias):
    """Pure-JAX reference: shared k x k 'same' conv applied to every plane."""
    B, C, H, W = x.shape
    k = weight.shape[0]
    p = k // 2
    xp = jnp.pad(x, ((0, 0), (0, 0), (p, p), (p, p)))
    out = jnp.zeros_like(x)
    for ky in range(k):
        for kx in range(k):
            out = out + weight[ky, kx] * xp[:, :, ky:ky + H, kx:kx + W]
    return out + bias[0]


if __name__ == "__main__":
    key = jax.random.PRNGKey(0)
    k_model, k_x = jax.random.split(key)
    model = DepthwiseConvPallas(k_model, kernel_size=3, stride=1, padding=1)
    x = jax.random.normal(k_x, (2, 4, 16, 16), jnp.float32)   # NCHW, like the PyTorch module
    out = model.forward(x)
    out = jax.block_until_ready(out)
    assert out.shape == (2, 4, 16, 16), out.shape
    assert bool(jnp.all(jnp.isfinite(out)))
    ref = _reference(x, model.weight, model.bias)
    err = float(jnp.max(jnp.abs(out - ref)))
    assert err < 1e-4, f"max abs error vs reference: {err}"
    print("KERNEL_OK")
</pallas_src>

<mosaic_0001>
module attributes {stable_mosaic.version = 11 : i64} {
  func.func @_dwconv_kernel(%arg0: i32, %arg1: memref<8x256xf32, #tpu.memory_space<vmem>>, %arg2: memref<1x256xi32, #tpu.memory_space<vmem>>, %arg3: memref<3x3xf32, #tpu.memory_space<smem>>, %arg4: memref<1xf32, #tpu.memory_space<smem>>, %arg5: memref<8x256xf32, #tpu.memory_space<vmem>>) attributes {dimension_semantics = [#tpu.dimension_semantics<parallel>], iteration_bounds = array<i64: 1>, scalar_prefetch = 0 : i64, scratch_operands = 0 : i64, tpu.core_type = #tpu.core_type<tc>, window_params = [{transform_indices = @transform_0, window_bounds = array<i64: 8, 256>}, {pipeline_mode = #tpu.pipeline_mode<synchronous>, transform_indices = @transform_1, window_bounds = array<i64: 1, 256>}, {transform_indices = @transform_2, window_bounds = array<i64: 3, 3>}, {transform_indices = @transform_3, window_bounds = array<i64: 1>}, {transform_indices = @transform_4, window_bounds = array<i64: 8, 256>}]} {
    %c0 = arith.constant 0 : index
    %c0_0 = arith.constant 0 : index
    %0 = vector.load %arg1[%c0, %c0_0] : memref<8x256xf32, #tpu.memory_space<vmem>>, vector<8x256xf32>
    %1 = tpu.iota {dimensions = array<i32: 1>} : vector<8x256xi32>
    %c0_1 = arith.constant 0 : index
    %c0_2 = arith.constant 0 : index
    %2 = vector.load %arg2[%c0_1, %c0_2] : memref<1x256xi32, #tpu.memory_space<vmem>>, vector<1x256xi32>
    %3 = vector.shape_cast %2 : vector<1x256xi32> to vector<1x256xi32>
    %4 = vector.broadcast %3 : vector<1x256xi32> to vector<8x256xi32>
    %cst = arith.constant 0.000000e+00 : f32
    %5 = vector.broadcast %cst : f32 to vector<8x256xf32>
    %c17_i32 = arith.constant 17 : i32
    %6 = tpu.dynamic_rotate %0 by %c17_i32 dim 1 : vector<8x256xf32>, i32 -> vector<8x256xf32>
    %c16_i32 = arith.constant 16 : i32
    %7 = vector.broadcast %c16_i32 : i32 to vector<8x256xi32>
    %8 = arith.cmpi sge, %1, %7 : vector<8x256xi32>
    %c1_i32 = arith.constant 1 : i32
    %9 = vector.broadcast %c1_i32 : i32 to vector<8x256xi32>
    %10 = arith.cmpi sge, %4, %9 : vector<8x256xi32>
    %11 = arith.andi %8, %10 : vector<8x256xi1>
    %cst_3 = arith.constant 0.000000e+00 : f32
    %12 = vector.broadcast %cst_3 : f32 to vector<8x256xf32>
    %13 = arith.select %11, %6, %12 : vector<8x256xi1>, vector<8x256xf32>
    %c0_4 = arith.constant 0 : index
    %c0_5 = arith.constant 0 : index
    %14 = memref.load %arg3[%c0_4, %c0_5] : memref<3x3xf32, #tpu.memory_space<smem>>
    %15 = vector.broadcast %14 : f32 to vector<8x256xf32>
    %16 = arith.mulf %15, %13 : vector<8x256xf32>
    %17 = arith.addf %5, %16 : vector<8x256xf32>
    %c16_i32_6 = arith.constant 16 : i32
    %18 = tpu.dynamic_rotate %0 by %c16_i32_6 dim 1 : vector<8x256xf32>, i32 -> vector<8x256xf32>
    %c16_i32_7 = arith.constant 16 : i32
    %19 = vector.broadcast %c16_i32_7 : i32 to vector<8x256xi32>
    %20 = arith.cmpi sge, %1, %19 : vector<8x256xi32>
    %cst_8 = arith.constant 0.000000e+00 : f32
    %21 = vector.broadcast %cst_8 : f32 to vector<8x256xf32>
    %22 = arith.select %20, %18, %21 : vector<8x256xi1>, vector<8x256xf32>
    %c0_9 = arith.constant 0 : index
    %c1 = arith.constant 1 : index
    %23 = memref.load %arg3[%c0_9, %c1] : memref<3x3xf32, #tpu.memory_space<smem>>
    %24 = vector.broadcast %23 : f32 to vector<8x256xf32>
    %25 = arith.mulf %24, %22 : vector<8x256xf32>
    %26 = arith.addf %17, %25 : vector<8x256xf32>
    %c15_i32 = arith.constant 15 : i32
    %27 = tpu.dynamic_rotate %0 by %c15_i32 dim 1 : vector<8x256xf32>, i32 -> vector<8x256xf32>
    %c16_i32_10 = arith.constant 16 : i32
    %28 = vector.broadcast %c16_i32_10 : i32 to vector<8x256xi32>
    %29 = arith.cmpi sge, %1, %28 : vector<8x256xi32>
    %c15_i32_11 = arith.constant 15 : i32
    %30 = vector.broadcast %c15_i32_11 : i32 to vector<8x256xi32>
    %31 = arith.cmpi slt, %4, %30 : vector<8x256xi32>
    %32 = arith.andi %29, %31 : vector<8x256xi1>
    %cst_12 = arith.constant 0.000000e+00 : f32
    %33 = vector.broadcast %cst_12 : f32 to vector<8x256xf32>
    %34 = arith.select %32, %27, %33 : vector<8x256xi1>, vector<8x256xf32>
    %c0_13 = arith.constant 0 : index
    %c2 = arith.constant 2 : index
    %35 = memref.load %arg3[%c0_13, %c2] : memref<3x3xf32, #tpu.memory_space<smem>>
    %36 = vector.broadcast %35 : f32 to vector<8x256xf32>
    %37 = arith.mulf %36, %34 : vector<8x256xf32>
    %38 = arith.addf %26, %37 : vector<8x256xf32>
    %c1_i32_14 = arith.constant 1 : i32
    %39 = tpu.dynamic_rotate %0 by %c1_i32_14 dim 1 : vector<8x256xf32>, i32 -> vector<8x256xf32>
    %c1_i32_15 = arith.constant 1 : i32
    %40 = vector.broadcast %c1_i32_15 : i32 to vector<8x256xi32>
    %41 = arith.cmpi sge, %4, %40 : vector<8x256xi32>
    %cst_16 = arith.constant 0.000000e+00 : f32
    %42 = vector.broadcast %cst_16 : f32 to vector<8x256xf32>
    %43 = arith.select %41, %39, %42 : vector<8x256xi1>, vector<8x256xf32>
    %c1_17 = arith.constant 1 : index
    %c0_18 = arith.constant 0 : index
    %44 = memref.load %arg3[%c1_17, %c0_18] : memref<3x3xf32, #tpu.memory_space<smem>>
    %45 = vector.broadcast %44 : f32 to vector<8x256xf32>
    %46 = arith.mulf %45, %43 : vector<8x256xf32>
    %47 = arith.addf %38, %46 : vector<8x256xf32>
    %c1_19 = arith.constant 1 : index
    %c1_20 = arith.constant 1 : index
    %48 = memref.load %arg3[%c1_19, %c1_20] : memref<3x3xf32, #tpu.memory_space<smem>>
    %49 = vector.broadcast %48 : f32 to vector<8x256xf32>
    %50 = arith.mulf %49, %0 : vector<8x256xf32>
    %51 = arith.addf %47, %50 : vector<8x256xf32>
    %c255_i32 = arith.constant 255 : i32
    %52 = tpu.dynamic_rotate %0 by %c255_i32 dim 1 : vector<8x256xf32>, i32 -> vector<8x256xf32>
    %c15_i32_21 = arith.constant 15 : i32
    %53 = vector.broadcast %c15_i32_21 : i32 to vector<8x256xi32>
    %54 = arith.cmpi slt, %4, %53 : vector<8x256xi32>
    %cst_22 = arith.constant 0.000000e+00 : f32
    %55 = vector.broadcast %cst_22 : f32 to vector<8x256xf32>
    %56 = arith.select %54, %52, %55 : vector<8x256xi1>, vector<8x256xf32>
    %c1_23 = arith.constant 1 : index
    %c2_24 = arith.constant 2 : index
    %57 = memref.load %arg3[%c1_23, %c2_24] : memref<3x3xf32, #tpu.memory_space<smem>>
    %58 = vector.broadcast %57 : f32 to vector<8x256xf32>
    %59 = arith.mulf %58, %56 : vector<8x256xf32>
    %60 = arith.addf %51, %59 : vector<8x256xf32>
    %c241_i32 = arith.constant 241 : i32
    %61 = tpu.dynamic_rotate %0 by %c241_i32 dim 1 : vector<8x256xf32>, i32 -> vector<8x256xf32>
    %c240_i32 = arith.constant 240 : i32
    %62 = vector.broadcast %c240_i32 : i32 to vector<8x256xi32>
    %63 = arith.cmpi slt, %1, %62 : vector<8x256xi32>
    %c1_i32_25 = arith.constant 1 : i32
    %64 = vector.broadcast %c1_i32_25 : i32 to vector<8x256xi32>
    %65 = arith.cmpi sge, %4, %64 : vector<8x256xi32>
    %66 = arith.andi %63, %65 : vector<8x256xi1>
    %cst_26 = arith.constant 0.000000e+00 : f32
    %67 = vector.broadcast %cst_26 : f32 to vector<8x256xf32>
    %68 = arith.select %66, %61, %67 : vector<8x256xi1>, vector<8x256xf32>
    %c2_27 = arith.constant 2 : index
    %c0_28 = arith.constant 0 : index
    %69 = memref.load %arg3[%c2_27, %c0_28] : memref<3x3xf32, #tpu.memory_space<smem>>
    %70 = vector.broadcast %69 : f32 to vector<8x256xf32>
    %71 = arith.mulf %70, %68 : vector<8x256xf32>
    %72 = arith.addf %60, %71 : vector<8x256xf32>
    %c240_i32_29 = arith.constant 240 : i32
    %73 = tpu.dynamic_rotate %0 by %c240_i32_29 dim 1 : vector<8x256xf32>, i32 -> vector<8x256xf32>
    %c240_i32_30 = arith.constant 240 : i32
    %74 = vector.broadcast %c240_i32_30 : i32 to vector<8x256xi32>
    %75 = arith.cmpi slt, %1, %74 : vector<8x256xi32>
    %cst_31 = arith.constant 0.000000e+00 : f32
    %76 = vector.broadcast %cst_31 : f32 to vector<8x256xf32>
    %77 = arith.select %75, %73, %76 : vector<8x256xi1>, vector<8x256xf32>
    %c2_32 = arith.constant 2 : index
    %c1_33 = arith.constant 1 : index
    %78 = memref.load %arg3[%c2_32, %c1_33] : memref<3x3xf32, #tpu.memory_space<smem>>
    %79 = vector.broadcast %78 : f32 to vector<8x256xf32>
    %80 = arith.mulf %79, %77 : vector<8x256xf32>
    %81 = arith.addf %72, %80 : vector<8x256xf32>
    %c239_i32 = arith.constant 239 : i32
    %82 = tpu.dynamic_rotate %0 by %c239_i32 dim 1 : vector<8x256xf32>, i32 -> vector<8x256xf32>
    %c240_i32_34 = arith.constant 240 : i32
    %83 = vector.broadcast %c240_i32_34 : i32 to vector<8x256xi32>
    %84 = arith.cmpi slt, %1, %83 : vector<8x256xi32>
    %c15_i32_35 = arith.constant 15 : i32
    %85 = vector.broadcast %c15_i32_35 : i32 to vector<8x256xi32>
    %86 = arith.cmpi slt, %4, %85 : vector<8x256xi32>
    %87 = arith.andi %84, %86 : vector<8x256xi1>
    %cst_36 = arith.constant 0.000000e+00 : f32
    %88 = vector.broadcast %cst_36 : f32 to vector<8x256xf32>
    %89 = arith.select %87, %82, %88 : vector<8x256xi1>, vector<8x256xf32>
    %c2_37 = arith.constant 2 : index
    %c2_38 = arith.constant 2 : index
    %90 = memref.load %arg3[%c2_37, %c2_38] : memref<3x3xf32, #tpu.memory_space<smem>>
    %91 = vector.broadcast %90 : f32 to vector<8x256xf32>
    %92 = arith.mulf %91, %89 : vector<8x256xf32>
    %93 = arith.addf %81, %92 : vector<8x256xf32>
    %c0_39 = arith.constant 0 : index
    %94 = memref.load %arg4[%c0_39] : memref<1xf32, #tpu.memory_space<smem>>
    %95 = vector.broadcast %94 : f32 to vector<8x256xf32>
    %96 = arith.addf %93, %95 : vector<8x256xf32>
    %c0_40 = arith.constant 0 : index
    %c0_41 = arith.constant 0 : index
    %97 = vector.load %arg5[%c0_40, %c0_41] : memref<8x256xf32, #tpu.memory_space<vmem>>, vector<8x256xf32>
    tpu.vector_store %arg5[%c0_40, %c0_41], %96 {strides = array<i32>} : memref<8x256xf32, #tpu.memory_space<vmem>>, vector<8x256xf32>,
    return
  }
  func.func @transform_0(%arg0: i32) -> (i32, i32) {
    %c0_i32 = arith.constant 0 : i32
    %c0_i32_0 = arith.constant 0 : i32
    return %arg0, %c0_i32 : i32, i32
  }
  func.func @transform_1(%arg0: i32) -> (i32, i32) {
    %c0_i32 = arith.constant 0 : i32
    %c0_i32_0 = arith.constant 0 : i32
    %c0_i32_1 = arith.constant 0 : i32
    return %c0_i32, %c0_i32_0 : i32, i32
  }
  func.func @transform_2(%arg0: i32) -> (i32, i32) {
    %c0_i32 = arith.constant 0 : i32
    %c0_i32_0 = arith.constant 0 : i32
    %c0_i32_1 = arith.constant 0 : i32
    return %c0_i32, %c0_i32_0 : i32, i32
  }
  func.func @transform_3(%arg0: i32) -> i32 {
    %c0_i32 = arith.constant 0 : i32
    %c0_i32_0 = arith.constant 0 : i32
    return %c0_i32 : i32
  }
  func.func @transform_4(%arg0: i32) -> (i32, i32) {
    %c0_i32 = arith.constant 0 : i32
    %c0_i32_0 = arith.constant 0 : i32
    return %arg0, %c0_i32 : i32, i32
  }
}

</mosaic_0001>

<llo_original>
// kernel: _forward.1
$region0: #{_forward.1}
  #allocation0 [shape = 'u32[]', space=smem, size = 0x4, offset = 0x4, fixed_abs, tag = 'smem constant byte address 0x4 - core index']
  #allocation1 [shape = 'u32[144,128]{1,0:T(1,128)}', space=vmem, size = 0x12000, scoped, tag = 'internal scratch']
  #allocation2 [shape = 'f32[1]{0:T(128)S(6)}', space=smem, size = 0x200, scoped, tag = 'scoped memory for _forward.1']
  %s0 = inlined_call_operand.vmem [shape: f32[8,256], index: 0, kind: input, shape index: {}]
  %s1 = inlined_call_operand.vmem [shape: s32[1,256], index: 1, kind: input, shape index: {}]
  %s2 = inlined_call_operand.vmem [shape: f32[3,3], index: 2, kind: input, shape index: {}]
  %s3 = inlined_call_operand.<no memory space> [shape: f32[1], index: 3, kind: input, shape index: {}]
  %s4 = inlined_call_operand.vmem [shape: f32[8,256], index: 4, kind: output, shape index: {}]
  %s5 = sld [smem:[#allocation0]]
  $region30: #{_forward.1} parent=0
    _
  %s7 = ssub.s32 1, %s5
  %s8 = scalar_select 0, %s7, %s5
  %9 = sst [smem:[#allocation2]] %s3
  $region1: #{_forward.1} parent=0
    #allocation3 [shape = 'u8[2048]{0}', space=smem, size = 0x800, scoped, tag = 'input window, operand 2, single buffered']
    #allocation4 [shape = 's32[1]{0}', space=sflag, size = 0x4, scoped, tag = 'scoped memory for _forward.1']
    %10 = vsyncpa [#allocation4], 0
    // Predicated region
    $region2: #{_forward.1} parent=1 // pred_check
      _
    $region3: #{_forward.1} parent=1 // pred_check_branch
      %12 = sbr.rel (0) target = $region5
    $region4: #{_forward.1} parent=1 // pred_region
      _
    $region5: #{_forward.1} parent=1 // pred_fallthru
      _
    // Predicated region
    $region6: #{_forward.1} parent=1 // pred_check
      _
    $region7: #{_forward.1} parent=1 // pred_check_branch
      %14 = sbr.rel (0) target = $region9
    $region8: #{_forward.1} parent=1 // pred_region
      _
    $region9: #{_forward.1} parent=1 // pred_fallthru
      _
    // Predicated region
    $region10: #{_forward.1} parent=1 // pred_check
      _
    $region11: #{_forward.1} parent=1 // pred_check_branch
      %16 = sbr.rel (0) target = $region13
    $region12: #{_forward.1} parent=1 // pred_region
      %s18 = ssub.s32 64, 64
      %19 = vsyncadd [#allocation4], %s18
      %s21 = sshll.u32 %s2, 4
      %s22 = int_to_ptr.vmem [resolvable:$true] %s21
      %24 = dma.vmem_to_smem %s22, 64, [#allocation3], [#allocation4]
    $region13: #{_forward.1} parent=1 // pred_fallthru
      _
    // Predicated region
    $region14: #{_forward.1} parent=1 // pred_check
      _
    $region15: #{_forward.1} parent=1 // pred_check_branch
      %26 = sbr.rel (0) target = $region17
    $region16: #{_forward.1} parent=1 // pred_region
      _
    $region17: #{_forward.1} parent=1 // pred_fallthru
      _
    // Predicated region
    $region18: #{_forward.1} parent=1 // pred_check
      _
    $region19: #{_forward.1} parent=1 // pred_check_branch
      %28 = sbr.rel (0) target = $region21
    $region20: #{_forward.1} parent=1 // pred_region
      %29 = dma.done [#allocation4], 64
    $region21: #{_forward.1} parent=1 // pred_fallthru
      _
    %30 = sfence
    %v31 = vld [vmem:[%s0] sm:$0xff]
    %v32 = vld [vmem:[%s0 + $0x8] sm:$0xff]
    %v33 = vlaneseq
    %v34 = vand.u32 %v33, 127
    %v35 = vadd.s32 %v34, 128
    %v36 = vld [vmem:[%s1] sm:$0x3]
    %v37 = vlaneseq
    %v38 = vshrl.u32 %v37, 7
    %v39 = vsub.s32 0, %v38
    %v40 = vrot.slane %v36, %v39
    %v41 = vlaneseq
    %v42 = vshrl.u32 %v41, 7
    %v43 = vsub.s32 1, %v42
    %v44 = vrot.slane %v36, %v43
    %45 = vrot.lane.b32.xlu0 %v31, 17
    %v46 = vpop.permute.xlu0 %45
    %47 = vrot.lane.b32.xlu0 %v32, 17
    %v48 = vpop.permute.xlu0 %47
    %vm49 = vcmp.lt.s32.totalorder %v34, 17
    %v50 = vsel %vm49, %v46, %v48
    %v51 = vsel %vm49, %v48, %v46
    %vm52 = vcmp.ge.s32.totalorder %v34, 16
    %vm53 = vcmp.ge.s32.totalorder %v35, 16
    %vm54 = vcmp.ge.s32.totalorder %v40, 1
    %vm55 = vcmp.ge.s32.totalorder %v44, 1
    %vm56 = vmand %vm52, %vm54
    %vm57 = vmand %vm53, %vm55
    %v58 = vsel %vm56, %v51, 0.0
    %v59 = vsel %vm57, %v50, 0.0
    %s60 = sld [smem:[#allocation3]]
    %v61 = vstv %s60
    %v62 = vmul.f32 %v61, %v58
    %v63 = vmul.f32 %v61, %v59
    %v64 = vadd.f32 %v62, 0.0
    %v65 = vadd.f32 %v63, 0.0
    %66 = vrot.lane.b32.xlu0 %v31, 16
    %v67 = vpop.permute.xlu0 %66
    %68 = vrot.lane.b32.xlu0 %v32, 16
    %v69 = vpop.permute.xlu0 %68
    %vm70 = vcmp.lt.s32.totalorder %v34, 16
    %v71 = vsel %vm70, %v67, %v69
    %v72 = vsel %vm70, %v69, %v67
    %v73 = vsel %vm52, %v72, 0.0
    %v74 = vsel %vm53, %v71, 0.0
    %s75 = sld [smem:[#allocation3 + $0x1]]
    %v76 = vstv %s75
    %v77 = vmul.f32 %v76, %v73
    %v78 = vmul.f32 %v76, %v74
    %v79 = vadd.f32 %v64, %v77
    %v80 = vadd.f32 %v65, %v78
    %81 = vrot.lane.b32.xlu0 %v31, 15
    %v82 = vpop.permute.xlu0 %81
    %83 = vrot.lane.b32.xlu0 %v32, 15
    %v84 = vpop.permute.xlu0 %83
    %vm85 = vcmp.lt.s32.totalorder %v34, 15
    %v86 = vsel %vm85, %v82, %v84
    %v87 = vsel %vm85, %v84, %v82
    %vm88 = vcmp.lt.s32.totalorder %v40, 15
    %vm89 = vcmp.lt.s32.totalorder %v44, 15
    %vm90 = vmand %vm52, %vm88
    %vm91 = vmand %vm53, %vm89
    %v92 = vsel %vm90, %v87, 0.0
    %v93 = vsel %vm91, %v86, 0.0
    %s94 = sld [smem:[#allocation3 + $0x2]]
    %v95 = vstv %s94
    %v96 = vmul.f32 %v95, %v92
    %v97 = vmul.f32 %v95, %v93
    %v98 = vadd.f32 %v79, %v96
    %v99 = vadd.f32 %v80, %v97
    %100 = vrot.lane.b32.xlu0 %v31, 1
    %v101 = vpop.permute.xlu0 %100
    %102 = vrot.lane.b32.xlu0 %v32, 1
    %v103 = vpop.permute.xlu0 %102
    %vm104 = vcmp.lt.s32.totalorder %v34, 1
    %v105 = vsel %vm104, %v101, %v103
    %v106 = vsel %vm104, %v103, %v101
    %v107 = vsel %vm54, %v106, 0.0
    %v108 = vsel %vm55, %v105, 0.0
    %s109 = sld [smem:[#allocation3 + $0x80]]
    %v110 = vstv %s109
    %v111 = vmul.f32 %v110, %v107
    %v112 = vmul.f32 %v110, %v108
    %v113 = vadd.f32 %v98, %v111
    %v114 = vadd.f32 %v99, %v112
    %s115 = sld [smem:[#allocation3 + $0x81]]
    %v116 = vstv %s115
    %v117 = vmul.f32 %v116, %v31
    %v118 = vmul.f32 %v116, %v32
    %v119 = vadd.f32 %v113, %v117
    %v120 = vadd.f32 %v114, %v118
    %121 = vrot.lane.b32.xlu0 %v31, 127
    %v122 = vpop.permute.xlu0 %121
    %123 = vrot.lane.b32.xlu0 %v32, 127
    %v124 = vpop.permute.xlu0 %123
    %vm125 = vcmp.lt.s32.totalorder %v34, 127
    %v126 = vsel %vm125, %v122, %v124
    %v127 = vsel %vm125, %v124, %v122
    %v128 = vsel %vm88, %v126, 0.0
    %v129 = vsel %vm89, %v127, 0.0
    %s130 = sld [smem:[#allocation3 + $0x82]]
    %v131 = vstv %s130
    %v132 = vmul.f32 %v131, %v128
    %v133 = vmul.f32 %v131, %v129
    %v134 = vadd.f32 %v119, %v132
    %v135 = vadd.f32 %v120, %v133
    %136 = vrot.lane.b32.xlu0 %v31, 113
    %v137 = vpop.permute.xlu0 %136
    %138 = vrot.lane.b32.xlu0 %v32, 113
    %v139 = vpop.permute.xlu0 %138
    %vm140 = vcmp.lt.s32.totalorder %v34, 113
    %v141 = vsel %vm140, %v137, %v139
    %v142 = vsel %vm140, %v139, %v137
    %vm143 = vcmp.lt.s32.totalorder %v34, 240
    %vm144 = vcmp.lt.s32.totalorder %v35, 240
    %vm145 = vmand %vm143, %vm54
    %vm146 = vmand %vm144, %vm55
    %v147 = vsel %vm145, %v141, 0.0
    %v148 = vsel %vm146, %v142, 0.0
    %s149 = sld [smem:[#allocation3 + $0x100]]
    %v150 = vstv %s149
    %v151 = vmul.f32 %v150, %v147
    %v152 = vmul.f32 %v150, %v148
    %v153 = vadd.f32 %v134, %v151
    %v154 = vadd.f32 %v135, %v152
    %155 = vrot.lane.b32.xlu0 %v31, 112
    %v156 = vpop.permute.xlu0 %155
    %157 = vrot.lane.b32.xlu0 %v32, 112
    %v158 = vpop.permute.xlu0 %157
    %vm159 = vcmp.lt.s32.totalorder %v34, 112
    %v160 = vsel %vm159, %v156, %v158
    %v161 = vsel %vm159, %v158, %v156
    %v162 = vsel %vm143, %v160, 0.0
    %v163 = vsel %vm144, %v161, 0.0
    %s164 = sld [smem:[#allocation3 + $0x101]]
    %v165 = vstv %s164
    %v166 = vmul.f32 %v165, %v162
    %v167 = vmul.f32 %v165, %v163
    %v168 = vadd.f32 %v153, %v166
    %v169 = vadd.f32 %v154, %v167
    %170 = vrot.lane.b32.xlu0 %v31, 111
    %v171 = vpop.permute.xlu0 %170
    %172 = vrot.lane.b32.xlu0 %v32, 111
    %v173 = vpop.permute.xlu0 %172
    %vm174 = vcmp.lt.s32.totalorder %v34, 111
    %v175 = vsel %vm174, %v171, %v173
    %v176 = vsel %vm174, %v173, %v171
    %vm177 = vmand %vm143, %vm88
    %vm178 = vmand %vm144, %vm89
    %v179 = vsel %vm177, %v175, 0.0
    %v180 = vsel %vm178, %v176, 0.0
    %s181 = sld [smem:[#allocation3 + $0x102]]
    %v182 = vstv %s181
    %v183 = vmul.f32 %v182, %v179
    %v184 = vmul.f32 %v182, %v180
    %v185 = vadd.f32 %v168, %v183
    %v186 = vadd.f32 %v169, %v184
    %s187 = sld [smem:[#allocation2]]
    %v188 = vstv %s187
    %v189 = vadd.f32 %v185, %v188
    %v190 = vadd.f32 %v186, %v188
    %191 = vst [vmem:[%s4] sm:$0xff] %v189
    %192 = vst [vmem:[%s4 + $0x8] sm:$0xff] %v190
    // Predicated region
    $region22: #{_forward.1} parent=1 // pred_check
      _
    $region23: #{_forward.1} parent=1 // pred_check_branch
      %194 = sbr.rel (0) target = $region25
    $region24: #{_forward.1} parent=1 // pred_region
      _
    $region25: #{_forward.1} parent=1 // pred_fallthru
      _
    // Predicated region
    $region26: #{_forward.1} parent=1 // pred_check
      _
    $region27: #{_forward.1} parent=1 // pred_check_branch
      %196 = sbr.rel (0) target = $region29
    $region28: #{_forward.1} parent=1 // pred_region
      _
    $region29: #{_forward.1} parent=1 // pred_fallthru
      _
    %197 = vsyncpa [#allocation4], 1

</llo_original>
